<compile_context>
chip_gen: v7x
topology: tpu7x:2x2x1
jax: 0.10.0
libtpu: 0.0.40
codegen_flags: <defaults>
</compile_context>

<pallas_src>
import jax
import jax.numpy as jnp
from jax.experimental import pallas as pl
from jax.experimental.pallas import tpu as pltpu

STATE_DIM = 8
HID1 = 128
HID2 = 64
ACTION_DIM = 4

LANE = 128            # TPU lane width: batch lives on the lane axis
MAX_BATCH_TILE = 512  # batch rows per grid step (multiple of 128)


def _round_up(n, m):
    return ((n + m - 1) // m) * m


def _mlp_softmax_kernel(xT_ref, w1_ref, b1_ref, w2_ref, b2_ref, w3_ref, b3_ref, o_ref):
    # Entire hot path (3 matmuls + relus + stable softmax) fused on-chip.
    xT = xT_ref[...]                                                       # [8,  tb]
    h1 = jnp.dot(w1_ref[...], xT, preferred_element_type=jnp.float32) + b1_ref[...]
    h1 = jnp.maximum(h1, 0.0)                                              # [128, tb]
    h2 = jnp.dot(w2_ref[...], h1, preferred_element_type=jnp.float32) + b2_ref[...]
    h2 = jnp.maximum(h2, 0.0)                                              # [64, tb]
    logits = jnp.dot(w3_ref[...], h2, preferred_element_type=jnp.float32) + b3_ref[...]
    # numerically-stable softmax along the action axis (sublane axis, size 4)
    m = jnp.max(logits, axis=0, keepdims=True)                             # [1, tb]
    e = jnp.exp(logits - m)                                                # [4, tb]
    denom = jnp.sum(e, axis=0, keepdims=True)                              # [1, tb]
    # exact divide: rows sum to 1 to fp32 roundoff (approx vrcp was too coarse)
    o_ref[...] = (e / denom).astype(o_ref.dtype)


@jax.jit
def action_forward(x, params):
    """x: [B, STATE_DIM] float32 -> [B, ACTION_DIM] float32 (softmax probs)."""
    w1, b1, w2, b2, w3, b3 = params
    B = x.shape[0]
    tb = min(MAX_BATCH_TILE, _round_up(B, LANE))   # lane-aligned batch tile
    Bp = _round_up(B, tb)

    # Single fused pass over x: transpose + lane-pad to [STATE_DIM, Bp].
    xT = jnp.zeros((STATE_DIM, Bp), jnp.float32).at[:, :B].set(x.T)

    flops = 2 * Bp * (STATE_DIM * HID1 + HID1 * HID2 + HID2 * ACTION_DIM)
    bytes_accessed = 4 * (
        Bp * (STATE_DIM + ACTION_DIM)
        + HID1 * STATE_DIM + HID1
        + HID2 * HID1 + HID2
        + ACTION_DIM * HID2 + ACTION_DIM
    )

    grid = (Bp // tb,)
    probs_T = pl.pallas_call(
        _mlp_softmax_kernel,
        out_shape=jax.ShapeDtypeStruct((ACTION_DIM, Bp), jnp.float32),
        grid=grid,
        in_specs=[
            pl.BlockSpec((STATE_DIM, tb), lambda i: (0, i)),      # x^T tile (lane-dense)
            pl.BlockSpec((HID1, STATE_DIM), lambda i: (0, 0)),    # W1 (resident)
            pl.BlockSpec((HID1, 1), lambda i: (0, 0)),            # b1
            pl.BlockSpec((HID2, HID1), lambda i: (0, 0)),         # W2
            pl.BlockSpec((HID2, 1), lambda i: (0, 0)),            # b2
            pl.BlockSpec((ACTION_DIM, HID2), lambda i: (0, 0)),   # W3
            pl.BlockSpec((ACTION_DIM, 1), lambda i: (0, 0)),      # b3
        ],
        out_specs=pl.BlockSpec((ACTION_DIM, tb), lambda i: (0, i)),  # lane-dense output
        compiler_params=pltpu.CompilerParams(
            dimension_semantics=("parallel",)),                  # megacore-shardable
        cost_estimate=pl.CostEstimate(
            flops=flops,
            transcendentals=Bp * ACTION_DIM,
            bytes_accessed=bytes_accessed),
    )(xT, w1, b1, w2, b2, w3, b3)

    # probs_T: [ACTION_DIM, Bp] -> [B, ACTION_DIM]  (tiny slice+transpose)
    return probs_T[:, :B].T


def init_params(key):
    """Deterministic init mirroring torch.nn.Linear default (U(-1/sqrt(fan_in), +)).

    Weights are kept in the PyTorch [out_features, in_features] layout; biases
    are stored as column vectors [out_features, 1] for the transposed kernel.
    """
    def linear(k, fan_in, fan_out):
        kw, kb = jax.random.split(k)
        bound = 1.0 / jnp.sqrt(jnp.float32(fan_in))
        w = jax.random.uniform(kw, (fan_out, fan_in), jnp.float32, -bound, bound)
        b = jax.random.uniform(kb, (fan_out, 1), jnp.float32, -bound, bound)
        return w, b

    k1, k2, k3 = jax.random.split(key, 3)
    w1, b1 = linear(k1, STATE_DIM, HID1)
    w2, b2 = linear(k2, HID1, HID2)
    w3, b3 = linear(k3, HID2, ACTION_DIM)
    return (w1, b1, w2, b2, w3, b3)


def _reference(x, params):
    w1, b1, w2, b2, w3, b3 = params
    h = jnp.maximum(x @ w1.T + b1.T, 0.0)
    h = jnp.maximum(h @ w2.T + b2.T, 0.0)
    logits = h @ w3.T + b3.T
    return jax.nn.softmax(logits, axis=-1)


if __name__ == "__main__":
    key = jax.random.PRNGKey(0)
    kp, kx1, kx2 = jax.random.split(key, 3)
    params = init_params(kp)

    # small batch matching the module's typical usage (batch=2, state_dim=8)
    x_small = jax.random.normal(kx1, (2, STATE_DIM), jnp.float32)
    probs = action_forward(x_small, params)
    jax.block_until_ready(probs)
    ref = _reference(x_small, params)
    assert probs.shape == (2, ACTION_DIM)
    # exact divide -> rows sum to 1 within fp32 roundoff
    assert jnp.allclose(jnp.sum(probs, axis=-1), 1.0, atol=1e-4)
    assert jnp.allclose(probs, ref, atol=2e-3, rtol=2e-3)

    # larger non-aligned batch: exercises lane padding and a multi-step parallel grid
    x_big = jax.random.normal(kx2, (777, STATE_DIM), jnp.float32)
    probs_big = action_forward(x_big, params)
    jax.block_until_ready(probs_big)
    ref_big = _reference(x_big, params)
    assert probs_big.shape == (777, ACTION_DIM)
    assert jnp.allclose(jnp.sum(probs_big, axis=-1), 1.0, atol=1e-4)
    assert jnp.allclose(probs_big, ref_big, atol=2e-3, rtol=2e-3)

    print("KERNEL_OK")
</pallas_src>

<mosaic_0001>
module attributes {stable_mosaic.version = 11 : i64} {
  func.func @_mlp_softmax_kernel(%arg0: i32, %arg1: memref<8x128xf32, #tpu.memory_space<vmem>>, %arg2: memref<128x8xf32, #tpu.memory_space<vmem>>, %arg3: memref<128x1xf32, #tpu.memory_space<vmem>>, %arg4: memref<64x128xf32, #tpu.memory_space<vmem>>, %arg5: memref<64x1xf32, #tpu.memory_space<vmem>>, %arg6: memref<4x64xf32, #tpu.memory_space<vmem>>, %arg7: memref<4x1xf32, #tpu.memory_space<vmem>>, %arg8: memref<4x128xf32, #tpu.memory_space<vmem>>) attributes {dimension_semantics = [#tpu.dimension_semantics<parallel>], iteration_bounds = array<i64: 1>, scalar_prefetch = 0 : i64, scratch_operands = 0 : i64, tpu.core_type = #tpu.core_type<tc>, window_params = [{transform_indices = @transform_0, window_bounds = array<i64: 8, 128>}, {pipeline_mode = #tpu.pipeline_mode<synchronous>, transform_indices = @transform_1, window_bounds = array<i64: 128, 8>}, {pipeline_mode = #tpu.pipeline_mode<synchronous>, transform_indices = @transform_2, window_bounds = array<i64: 128, 1>}, {pipeline_mode = #tpu.pipeline_mode<synchronous>, transform_indices = @transform_3, window_bounds = array<i64: 64, 128>}, {pipeline_mode = #tpu.pipeline_mode<synchronous>, transform_indices = @transform_4, window_bounds = array<i64: 64, 1>}, {pipeline_mode = #tpu.pipeline_mode<synchronous>, transform_indices = @transform_5, window_bounds = array<i64: 4, 64>}, {pipeline_mode = #tpu.pipeline_mode<synchronous>, transform_indices = @transform_6, window_bounds = array<i64: 4, 1>}, {transform_indices = @transform_7, window_bounds = array<i64: 4, 128>}]} {
    %c0 = arith.constant 0 : index
    %c0_0 = arith.constant 0 : index
    %0 = vector.load %arg1[%c0, %c0_0] : memref<8x128xf32, #tpu.memory_space<vmem>>, vector<8x128xf32>
    %c0_1 = arith.constant 0 : index
    %c0_2 = arith.constant 0 : index
    %1 = vector.load %arg2[%c0_1, %c0_2] : memref<128x8xf32, #tpu.memory_space<vmem>>, vector<128x8xf32>
    %cst = arith.constant dense<0.000000e+00> : vector<128x128xf32>
    %2 = tpu.matmul %1, %0, %cst {dimension_numbers = #tpu.dot_dimension_numbers<[1], [0], [0], [1], [0, 0, 1, 1], [], []>} : vector<128x8xf32>, vector<8x128xf32>, vector<128x128xf32> -> vector<128x128xf32>
    %c0_3 = arith.constant 0 : index
    %c0_4 = arith.constant 0 : index
    %3 = vector.load %arg3[%c0_3, %c0_4] : memref<128x1xf32, #tpu.memory_space<vmem>>, vector<128x1xf32>
    %4 = vector.broadcast %3 : vector<128x1xf32> to vector<128x128xf32>
    %5 = arith.addf %2, %4 : vector<128x128xf32>
    %cst_5 = arith.constant 0.000000e+00 : f32
    %6 = vector.broadcast %cst_5 : f32 to vector<128x128xf32>
    %7 = arith.maximumf %5, %6 : vector<128x128xf32>
    %c0_6 = arith.constant 0 : index
    %c0_7 = arith.constant 0 : index
    %8 = vector.load %arg4[%c0_6, %c0_7] : memref<64x128xf32, #tpu.memory_space<vmem>>, vector<64x128xf32>
    %cst_8 = arith.constant dense<0.000000e+00> : vector<64x128xf32>
    %9 = tpu.matmul %8, %7, %cst_8 {dimension_numbers = #tpu.dot_dimension_numbers<[1], [0], [0], [1], [0, 0, 1, 1], [], []>} : vector<64x128xf32>, vector<128x128xf32>, vector<64x128xf32> -> vector<64x128xf32>
    %c0_9 = arith.constant 0 : index
    %c0_10 = arith.constant 0 : index
    %10 = vector.load %arg5[%c0_9, %c0_10] : memref<64x1xf32, #tpu.memory_space<vmem>>, vector<64x1xf32>
    %11 = vector.broadcast %10 : vector<64x1xf32> to vector<64x128xf32>
    %12 = arith.addf %9, %11 : vector<64x128xf32>
    %cst_11 = arith.constant 0.000000e+00 : f32
    %13 = vector.broadcast %cst_11 : f32 to vector<64x128xf32>
    %14 = arith.maximumf %12, %13 : vector<64x128xf32>
    %c0_12 = arith.constant 0 : index
    %c0_13 = arith.constant 0 : index
    %15 = vector.load %arg6[%c0_12, %c0_13] : memref<4x64xf32, #tpu.memory_space<vmem>>, vector<4x64xf32>
    %cst_14 = arith.constant dense<0.000000e+00> : vector<4x128xf32>
    %16 = tpu.matmul %15, %14, %cst_14 {dimension_numbers = #tpu.dot_dimension_numbers<[1], [0], [0], [1], [0, 0, 1, 1], [], []>} : vector<4x64xf32>, vector<64x128xf32>, vector<4x128xf32> -> vector<4x128xf32>
    %c0_15 = arith.constant 0 : index
    %c0_16 = arith.constant 0 : index
    %17 = vector.load %arg7[%c0_15, %c0_16] : memref<4x1xf32, #tpu.memory_space<vmem>>, vector<4x1xf32>
    %18 = vector.broadcast %17 : vector<4x1xf32> to vector<4x128xf32>
    %19 = arith.addf %16, %18 : vector<4x128xf32>
    %cst_17 = arith.constant dense<0xFF800000> : vector<128xf32>
    %20 = vector.multi_reduction <maximumf>, %19, %cst_17 [0] : vector<4x128xf32> to vector<128xf32>
    %21 = vector.shape_cast %20 : vector<128xf32> to vector<1x128xf32>
    %22 = vector.broadcast %21 : vector<1x128xf32> to vector<4x128xf32>
    %23 = arith.subf %19, %22 : vector<4x128xf32>
    %24 = math.exp %23 : vector<4x128xf32>
    %cst_18 = arith.constant dense<0.000000e+00> : vector<128xf32>
    %25 = vector.multi_reduction <add>, %24, %cst_18 [0] : vector<4x128xf32> to vector<128xf32>
    %26 = vector.shape_cast %25 : vector<128xf32> to vector<1x128xf32>
    %27 = vector.broadcast %26 : vector<1x128xf32> to vector<4x128xf32>
    %28 = arith.divf %24, %27 : vector<4x128xf32>
    %c0_19 = arith.constant 0 : index
    %c0_20 = arith.constant 0 : index
    %29 = vector.load %arg8[%c0_19, %c0_20] : memref<4x128xf32, #tpu.memory_space<vmem>>, vector<4x128xf32>
    tpu.vector_store %arg8[%c0_19, %c0_20], %28 {strides = array<i32>} : memref<4x128xf32, #tpu.memory_space<vmem>>, vector<4x128xf32>,
    return
  }
  func.func @transform_0(%arg0: i32) -> (i32, i32) {
    %c0_i32 = arith.constant 0 : i32
    %c0_i32_0 = arith.constant 0 : i32
    return %c0_i32, %arg0 : i32, i32
  }
  func.func @transform_1(%arg0: i32) -> (i32, i32) {
    %c0_i32 = arith.constant 0 : i32
    %c0_i32_0 = arith.constant 0 : i32
    %c0_i32_1 = arith.constant 0 : i32
    return %c0_i32, %c0_i32_0 : i32, i32
  }
  func.func @transform_2(%arg0: i32) -> (i32, i32) {
    %c0_i32 = arith.constant 0 : i32
    %c0_i32_0 = arith.constant 0 : i32
    %c0_i32_1 = arith.constant 0 : i32
    return %c0_i32, %c0_i32_0 : i32, i32
  }
  func.func @transform_3(%arg0: i32) -> (i32, i32) {
    %c0_i32 = arith.constant 0 : i32
    %c0_i32_0 = arith.constant 0 : i32
    %c0_i32_1 = arith.constant 0 : i32
    return %c0_i32, %c0_i32_0 : i32, i32
  }
  func.func @transform_4(%arg0: i32) -> (i32, i32) {
    %c0_i32 = arith.constant 0 : i32
    %c0_i32_0 = arith.constant 0 : i32
    %c0_i32_1 = arith.constant 0 : i32
    return %c0_i32, %c0_i32_0 : i32, i32
  }
  func.func @transform_5(%arg0: i32) -> (i32, i32) {
    %c0_i32 = arith.constant 0 : i32
    %c0_i32_0 = arith.constant 0 : i32
    %c0_i32_1 = arith.constant 0 : i32
    return %c0_i32, %c0_i32_0 : i32, i32
  }
  func.func @transform_6(%arg0: i32) -> (i32, i32) {
    %c0_i32 = arith.constant 0 : i32
    %c0_i32_0 = arith.constant 0 : i32
    %c0_i32_1 = arith.constant 0 : i32
    return %c0_i32, %c0_i32_0 : i32, i32
  }
  func.func @transform_7(%arg0: i32) -> (i32, i32) {
    %c0_i32 = arith.constant 0 : i32
    %c0_i32_0 = arith.constant 0 : i32
    return %c0_i32, %arg0 : i32, i32
  }
}

</mosaic_0001>

<llo_original>
// kernel: action_forward.1
$region0: #{action_forward.1}
  #allocation0 [shape = 'u32[]', space=smem, size = 0x4, offset = 0x4, fixed_abs, tag = 'smem constant byte address 0x4 - core index']
  #allocation1 [shape = 'u32[144,128]{1,0:T(1,128)}', space=vmem, size = 0x12000, scoped, tag = 'internal scratch']
  %s0 = inlined_call_operand.vmem [shape: f32[8,128], index: 0, kind: input, shape index: {}]
  %s1 = inlined_call_operand.vmem [shape: f32[128,8], index: 1, kind: input, shape index: {}]
  %s2 = inlined_call_operand.vmem [shape: f32[128,1], index: 2, kind: input, shape index: {}]
  %s3 = inlined_call_operand.vmem [shape: f32[64,128], index: 3, kind: input, shape index: {}]
  %s4 = inlined_call_operand.vmem [shape: f32[64,1], index: 4, kind: input, shape index: {}]
  %s5 = inlined_call_operand.vmem [shape: f32[4,64], index: 5, kind: input, shape index: {}]
  %s6 = inlined_call_operand.vmem [shape: f32[4,1], index: 6, kind: input, shape index: {}]
  %s7 = inlined_call_operand.vmem [shape: f32[4,128], index: 7, kind: output, shape index: {}]
  %s8 = sld [smem:[#allocation0]]
  $region38: #{action_forward.1} parent=0
    _
  %s10 = ssub.s32 1, %s8
  %s11 = scalar_select 0, %s10, %s8
  // Predicated region
  $region2: #{action_forward.1} parent=0 // pred_check
    _
  $region3: #{action_forward.1} parent=0 // pred_check_branch
    %13 = sbr.rel (0) target = $region5
  $region4: #{action_forward.1} parent=0 // pred_region
    _
  $region5: #{action_forward.1} parent=0 // pred_fallthru
    _
  // Predicated region
  $region6: #{action_forward.1} parent=0 // pred_check
    _
  $region7: #{action_forward.1} parent=0 // pred_check_branch
    %15 = sbr.rel (0) target = $region9
  $region8: #{action_forward.1} parent=0 // pred_region
    _
  $region9: #{action_forward.1} parent=0 // pred_fallthru
    _
  // Predicated region
  $region10: #{action_forward.1} parent=0 // pred_check
    _
  $region11: #{action_forward.1} parent=0 // pred_check_branch
    %17 = sbr.rel (0) target = $region13
  $region12: #{action_forward.1} parent=0 // pred_region
    _
  $region13: #{action_forward.1} parent=0 // pred_fallthru
    _
  // Predicated region
  $region14: #{action_forward.1} parent=0 // pred_check
    _
  $region15: #{action_forward.1} parent=0 // pred_check_branch
    %19 = sbr.rel (0) target = $region17
  $region16: #{action_forward.1} parent=0 // pred_region
    _
  $region17: #{action_forward.1} parent=0 // pred_fallthru
    _
  // Predicated region
  $region18: #{action_forward.1} parent=0 // pred_check
    _
  $region19: #{action_forward.1} parent=0 // pred_check_branch
    %21 = sbr.rel (0) target = $region21
  $region20: #{action_forward.1} parent=0 // pred_region
    _
  $region21: #{action_forward.1} parent=0 // pred_fallthru
    _
  // Predicated region
  $region22: #{action_forward.1} parent=0 // pred_check
    _
  $region23: #{action_forward.1} parent=0 // pred_check_branch
    %23 = sbr.rel (0) target = $region25
  $region24: #{action_forward.1} parent=0 // pred_region
    _
  $region25: #{action_forward.1} parent=0 // pred_fallthru
    _
  // Predicated region
  $region26: #{action_forward.1} parent=0 // pred_check
    _
  $region27: #{action_forward.1} parent=0 // pred_check_branch
    %25 = sbr.rel (0) target = $region29
  $region28: #{action_forward.1} parent=0 // pred_region
    _
  $region29: #{action_forward.1} parent=0 // pred_fallthru
    _
  %v26 = vld [vmem:[%s0] sm:$0xff]
  %v27 = vld [vmem:[%s1] sm:$0xff]
  %v28 = vld [vmem:[%s1 + $0x8] sm:$0xff]
  %v29 = vld [vmem:[%s1 + $0x10] sm:$0xff]
  %v30 = vld [vmem:[%s1 + $0x18] sm:$0xff]
  %v31 = vld [vmem:[%s1 + $0x20] sm:$0xff]
  %v32 = vld [vmem:[%s1 + $0x28] sm:$0xff]
  %v33 = vld [vmem:[%s1 + $0x30] sm:$0xff]
  %v34 = vld [vmem:[%s1 + $0x38] sm:$0xff]
  %v35 = vld [vmem:[%s1 + $0x40] sm:$0xff]
  %v36 = vld [vmem:[%s1 + $0x48] sm:$0xff]
  %v37 = vld [vmem:[%s1 + $0x50] sm:$0xff]
  %v38 = vld [vmem:[%s1 + $0x58] sm:$0xff]
  %v39 = vld [vmem:[%s1 + $0x60] sm:$0xff]
  %v40 = vld [vmem:[%s1 + $0x68] sm:$0xff]
  %v41 = vld [vmem:[%s1 + $0x70] sm:$0xff]
  %v42 = vld [vmem:[%s1 + $0x78] sm:$0xff]
  %v43 = vld [vmem:[%s2] sm:$0xff]
  %v44 = vld [vmem:[%s2 + $0x8] sm:$0xff]
  %v45 = vld [vmem:[%s2 + $0x10] sm:$0xff]
  %v46 = vld [vmem:[%s2 + $0x18] sm:$0xff]
  %v47 = vld [vmem:[%s2 + $0x20] sm:$0xff]
  %v48 = vld [vmem:[%s2 + $0x28] sm:$0xff]
  %v49 = vld [vmem:[%s2 + $0x30] sm:$0xff]
  %v50 = vld [vmem:[%s2 + $0x38] sm:$0xff]
  %v51 = vld [vmem:[%s2 + $0x40] sm:$0xff]
  %v52 = vld [vmem:[%s2 + $0x48] sm:$0xff]
  %v53 = vld [vmem:[%s2 + $0x50] sm:$0xff]
  %v54 = vld [vmem:[%s2 + $0x58] sm:$0xff]
  %v55 = vld [vmem:[%s2 + $0x60] sm:$0xff]
  %v56 = vld [vmem:[%s2 + $0x68] sm:$0xff]
  %v57 = vld [vmem:[%s2 + $0x70] sm:$0xff]
  %v58 = vld [vmem:[%s2 + $0x78] sm:$0xff]
  %60 = vset.pattern.permute.xlu0 0
  %61 = vperm.xlu0 %60, %v43
  %v62 = vpop.permute.xlu0 %61
  %65 = vset.pattern.permute.xlu0 0
  %66 = vperm.xlu0 %65, %v44
  %v67 = vpop.permute.xlu0 %66
  %70 = vset.pattern.permute.xlu0 0
  %71 = vperm.xlu0 %70, %v45
  %v72 = vpop.permute.xlu0 %71
  %75 = vset.pattern.permute.xlu0 0
  %76 = vperm.xlu0 %75, %v46
  %v77 = vpop.permute.xlu0 %76
  %80 = vset.pattern.permute.xlu0 0
  %81 = vperm.xlu0 %80, %v47
  %v82 = vpop.permute.xlu0 %81
  %85 = vset.pattern.permute.xlu0 0
  %86 = vperm.xlu0 %85, %v48
  %v87 = vpop.permute.xlu0 %86
  %90 = vset.pattern.permute.xlu0 0
  %91 = vperm.xlu0 %90, %v49
  %v92 = vpop.permute.xlu0 %91
  %95 = vset.pattern.permute.xlu0 0
  %96 = vperm.xlu0 %95, %v50
  %v97 = vpop.permute.xlu0 %96
  %100 = vset.pattern.permute.xlu0 0
  %101 = vperm.xlu0 %100, %v51
  %v102 = vpop.permute.xlu0 %101
  %105 = vset.pattern.permute.xlu0 0
  %106 = vperm.xlu0 %105, %v52
  %v107 = vpop.permute.xlu0 %106
  %110 = vset.pattern.permute.xlu0 0
  %111 = vperm.xlu0 %110, %v53
  %v112 = vpop.permute.xlu0 %111
  %115 = vset.pattern.permute.xlu0 0
  %116 = vperm.xlu0 %115, %v54
  %v117 = vpop.permute.xlu0 %116
  %120 = vset.pattern.permute.xlu0 0
  %121 = vperm.xlu0 %120, %v55
  %v122 = vpop.permute.xlu0 %121
  %125 = vset.pattern.permute.xlu0 0
  %126 = vperm.xlu0 %125, %v56
  %v127 = vpop.permute.xlu0 %126
  %130 = vset.pattern.permute.xlu0 0
  %131 = vperm.xlu0 %130, %v57
  %v132 = vpop.permute.xlu0 %131
  %135 = vset.pattern.permute.xlu0 0
  %136 = vperm.xlu0 %135, %v58
  %v137 = vpop.permute.xlu0 %136
  %vm139 = vcmask 64512
  %v141 = vsel %vm139, %v27, 0
  %v144 = vsel %vm139, %v28, 0
  %v147 = vsel %vm139, %v29, 0
  %v150 = vsel %vm139, %v30, 0
  %v153 = vsel %vm139, %v31, 0
  %v156 = vsel %vm139, %v32, 0
  %v159 = vsel %vm139, %v33, 0
  %v162 = vsel %vm139, %v34, 0
  %v165 = vsel %vm139, %v35, 0
  %v168 = vsel %vm139, %v36, 0
  %v171 = vsel %vm139, %v37, 0
  %v174 = vsel %vm139, %v38, 0
  %v177 = vsel %vm139, %v39, 0
  %v180 = vsel %vm139, %v40, 0
  %v183 = vsel %vm139, %v41, 0
  %v186 = vsel %vm139, %v42, 0
  %188 = vmatprep.subr.mxu0 0.0
  %189 = vmatpush1.msra.mxu0 %v26
  %190 = vmatprep.subr.mxu0 0.0
  %191 = vmatpush1.msra.mxu0 0.0
  %192 = vmatprep.subr.mxu0 0.0
  %193 = vmatpush1.msra.mxu0 0.0
  %194 = vmatprep.subr.mxu0 0.0
  %195 = vmatpush1.msra.mxu0 0.0
  %196 = vmatprep.subr.mxu0 0.0
  %197 = vmatpush1.msra.mxu0 0.0
  %198 = vmatprep.subr.mxu0 0.0
  %199 = vmatpush1.msra.mxu0 0.0
  %200 = vmatprep.subr.mxu0 0.0
  %201 = vmatpush1.msra.mxu0 0.0
  %202 = vmatprep.subr.mxu0 0.0
  %203 = vmatpush1.msra.mxu0 0.0
  %204 = vmatprep.subr.mxu0 0.0
  %205 = vmatpush1.msra.mxu0 0.0
  %206 = vmatprep.subr.mxu0 0.0
  %207 = vmatpush1.msra.mxu0 0.0
  %208 = vmatprep.subr.mxu0 0.0
  %209 = vmatpush1.msra.mxu0 0.0
  %210 = vmatprep.subr.mxu0 0.0
  %211 = vmatpush1.msra.mxu0 0.0
  %212 = vmatprep.subr.mxu0 0.0
  %213 = vmatpush1.msra.mxu0 0.0
  %214 = vmatprep.subr.mxu0 0.0
  %215 = vmatpush1.msra.mxu0 0.0
  %216 = vmatprep.subr.mxu0 0.0
  %217 = vmatpush1.msra.mxu0 0.0
  %218 = vmatprep.subr.mxu0 0.0
  %219 = vmatpush1.msra.mxu0 0.0
  %220 = vmatprep.subr.mxu0 0.0
  %221 = vmatpush1.msra.mxu0 0.0
  %222 = vmatprep.subr.mxu0 0.0
  %223 = vmatpush1.msra.mxu0 0.0
  %224 = vmatprep.subr.mxu0 0.0
  %225 = vmatpush1.msra.mxu0 0.0
  %226 = vmatprep.subr.mxu0 0.0
  %227 = vmatpush1.msra.mxu0 0.0
  %228 = vmatprep.subr.mxu0 0.0
  %229 = vmatpush1.msra.mxu0 0.0
  %230 = vmatprep.subr.mxu0 0.0
  %231 = vmatpush1.msra.mxu0 0.0
  %232 = vmatprep.subr.mxu0 0.0
  %233 = vmatpush1.msra.mxu0 0.0
  %234 = vmatprep.subr.mxu0 0.0
  %235 = vmatpush1.msra.mxu0 0.0
  %236 = vmatprep.subr.mxu0 0.0
  %237 = vmatpush1.msra.mxu0 0.0
  %238 = vmatprep.subr.mxu0 0.0
  %239 = vmatpush1.msra.mxu0 0.0
  %240 = vmatprep.subr.mxu0 0.0
  %241 = vmatpush1.msra.mxu0 0.0
  %242 = vmatprep.subr.mxu0 0.0
  %243 = vmatpush1.msra.mxu0 0.0
  %244 = vmatprep.subr.mxu0 0.0
  %245 = vmatpush1.msra.mxu0 0.0
  %246 = vmatprep.subr.mxu0 0.0
  %247 = vmatpush1.msra.mxu0 0.0
  %248 = vmatprep.subr.mxu0 0.0
  %249 = vmatpush1.msra.mxu0 0.0
  %250 = vmatprep.subr.mxu0 0.0
  %251 = vmatpush1.msra.mxu0 0.0
  %252 = vmatprep.mubr.f32.mxu0 0.0
  %253 = vmatmul.mubr.f32.gmra.mrb[0].mxu0 %v141
  %v254 = vpop.f32.mrb[0].mxu0
  %v255 = vadd.f32 %v62, %v254
  %v256 = vpop.f32.mrb[0].mxu0
  %257 = vmatprep.mubr.f32.mxu0 0.0
  %258 = vmatmul.mubr.f32.gmra.mrb[0].mxu0 %v144
  %v259 = vpop.f32.mrb[0].mxu0
  %v260 = vadd.f32 %v67, %v259
  %v261 = vpop.f32.mrb[0].mxu0
  %262 = vmatprep.mubr.f32.mxu0 0.0
  %263 = vmatmul.mubr.f32.gmra.mrb[0].mxu0 %v147
  %v264 = vpop.f32.mrb[0].mxu0
  %v265 = vadd.f32 %v72, %v264
  %v266 = vpop.f32.mrb[0].mxu0
  %267 = vmatprep.mubr.f32.mxu0 0.0
  %268 = vmatmul.mubr.f32.gmra.mrb[0].mxu0 %v150
  %v269 = vpop.f32.mrb[0].mxu0
  %v270 = vadd.f32 %v77, %v269
  %v271 = vpop.f32.mrb[0].mxu0
  %272 = vmatprep.mubr.f32.mxu0 0.0
  %273 = vmatmul.mubr.f32.gmra.mrb[0].mxu0 %v153
  %v274 = vpop.f32.mrb[0].mxu0
  %v275 = vadd.f32 %v82, %v274
  %v276 = vpop.f32.mrb[0].mxu0
  %277 = vmatprep.mubr.f32.mxu0 0.0
  %278 = vmatmul.mubr.f32.gmra.mrb[0].mxu0 %v156
  %v279 = vpop.f32.mrb[0].mxu0
  %v280 = vadd.f32 %v87, %v279
  %v281 = vpop.f32.mrb[0].mxu0
  %282 = vmatprep.mubr.f32.mxu0 0.0
  %283 = vmatmul.mubr.f32.gmra.mrb[0].mxu0 %v159
  %v284 = vpop.f32.mrb[0].mxu0
  %v285 = vadd.f32 %v92, %v284
  %v286 = vpop.f32.mrb[0].mxu0
  %287 = vmatprep.mubr.f32.mxu0 0.0
  %288 = vmatmul.mubr.f32.gmra.mrb[0].mxu0 %v162
  %v289 = vpop.f32.mrb[0].mxu0
  %v290 = vadd.f32 %v97, %v289
  %v291 = vpop.f32.mrb[0].mxu0
  %292 = vmatprep.mubr.f32.mxu0 0.0
  %293 = vmatmul.mubr.f32.gmra.mrb[0].mxu0 %v165
  %v294 = vpop.f32.mrb[0].mxu0
  %v295 = vadd.f32 %v102, %v294
  %v296 = vpop.f32.mrb[0].mxu0
  %297 = vmatprep.mubr.f32.mxu0 0.0
  %298 = vmatmul.mubr.f32.gmra.mrb[0].mxu0 %v168
  %v299 = vpop.f32.mrb[0].mxu0
  %v300 = vadd.f32 %v107, %v299
  %v301 = vpop.f32.mrb[0].mxu0
  %302 = vmatprep.mubr.f32.mxu0 0.0
  %303 = vmatmul.mubr.f32.gmra.mrb[0].mxu0 %v171
  %v304 = vpop.f32.mrb[0].mxu0
  %v305 = vadd.f32 %v112, %v304
  %v306 = vpop.f32.mrb[0].mxu0
  %307 = vmatprep.mubr.f32.mxu0 0.0
  %308 = vmatmul.mubr.f32.gmra.mrb[0].mxu0 %v174
  %v309 = vpop.f32.mrb[0].mxu0
  %v310 = vadd.f32 %v117, %v309
  %v311 = vpop.f32.mrb[0].mxu0
  %312 = vmatprep.mubr.f32.mxu0 0.0
  %313 = vmatmul.mubr.f32.gmra.mrb[0].mxu0 %v177
  %v314 = vpop.f32.mrb[0].mxu0
  %v315 = vadd.f32 %v122, %v314
  %v316 = vpop.f32.mrb[0].mxu0
  %317 = vmatprep.mubr.f32.mxu0 0.0
  %318 = vmatmul.mubr.f32.gmra.mrb[0].mxu0 %v180
  %v319 = vpop.f32.mrb[0].mxu0
  %v320 = vadd.f32 %v127, %v319
  %v321 = vpop.f32.mrb[0].mxu0
  %322 = vmatprep.mubr.f32.mxu0 0.0
  %323 = vmatmul.mubr.f32.gmra.mrb[0].mxu0 %v183
  %v324 = vpop.f32.mrb[0].mxu0
  %v325 = vadd.f32 %v132, %v324
  %v326 = vpop.f32.mrb[0].mxu0
  %327 = vmatprep.mubr.f32.mxu0 0.0
  %328 = vmatmul.mubr.f32.gmra.mrb[0].mxu0 %v186
  %v329 = vpop.f32.mrb[0].mxu0
  %v330 = vadd.f32 %v137, %v329
  %v331 = vpop.f32.mrb[0].mxu0
  %332 = vdwg.mxu0
  %v333 = vmax.f32 %v255, 0.0
  %v334 = vmax.f32 %v260, 0.0
  %v335 = vmax.f32 %v265, 0.0
  %v336 = vmax.f32 %v270, 0.0
  %v337 = vmax.f32 %v275, 0.0
  %v338 = vmax.f32 %v280, 0.0
  %v339 = vmax.f32 %v285, 0.0
  %v340 = vmax.f32 %v290, 0.0
  %v341 = vmax.f32 %v295, 0.0
  %v342 = vmax.f32 %v300, 0.0
  %v343 = vmax.f32 %v305, 0.0
  %v344 = vmax.f32 %v310, 0.0
  %v345 = vmax.f32 %v315, 0.0
  %v346 = vmax.f32 %v320, 0.0
  %v347 = vmax.f32 %v325, 0.0
  %v348 = vmax.f32 %v330, 0.0
  %v349 = vld [vmem:[%s3] sm:$0xff]
  %v350 = vld [vmem:[%s3 + $0x8] sm:$0xff]
  %v351 = vld [vmem:[%s3 + $0x10] sm:$0xff]
  %v352 = vld [vmem:[%s3 + $0x18] sm:$0xff]
  %v353 = vld [vmem:[%s3 + $0x20] sm:$0xff]
  %v354 = vld [vmem:[%s3 + $0x28] sm:$0xff]
  %v355 = vld [vmem:[%s3 + $0x30] sm:$0xff]
  %v356 = vld [vmem:[%s3 + $0x38] sm:$0xff]
  %v357 = vld [vmem:[%s4] sm:$0xff]
  %v358 = vld [vmem:[%s4 + $0x8] sm:$0xff]
  %v359 = vld [vmem:[%s4 + $0x10] sm:$0xff]
  %v360 = vld [vmem:[%s4 + $0x18] sm:$0xff]
  %v361 = vld [vmem:[%s4 + $0x20] sm:$0xff]
  %v362 = vld [vmem:[%s4 + $0x28] sm:$0xff]
  %v363 = vld [vmem:[%s4 + $0x30] sm:$0xff]
  %v364 = vld [vmem:[%s4 + $0x38] sm:$0xff]
  %366 = vset.pattern.permute.xlu0 0
  %367 = vperm.xlu0 %366, %v357
  %v368 = vpop.permute.xlu0 %367
  %371 = vset.pattern.permute.xlu0 0
  %372 = vperm.xlu0 %371, %v358
  %v373 = vpop.permute.xlu0 %372
  %376 = vset.pattern.permute.xlu0 0
  %377 = vperm.xlu0 %376, %v359
  %v378 = vpop.permute.xlu0 %377
  %381 = vset.pattern.permute.xlu0 0
  %382 = vperm.xlu0 %381, %v360
  %v383 = vpop.permute.xlu0 %382
  %386 = vset.pattern.permute.xlu0 0
  %387 = vperm.xlu0 %386, %v361
  %v388 = vpop.permute.xlu0 %387
  %391 = vset.pattern.permute.xlu0 0
  %392 = vperm.xlu0 %391, %v362
  %v393 = vpop.permute.xlu0 %392
  %396 = vset.pattern.permute.xlu0 0
  %397 = vperm.xlu0 %396, %v363
  %v398 = vpop.permute.xlu0 %397
  %401 = vset.pattern.permute.xlu0 0
  %402 = vperm.xlu0 %401, %v364
  %v403 = vpop.permute.xlu0 %402
  %405 = vmatprep.subr.mxu0 0.0
  %406 = vmatpush1.msra.mxu0 %v333
  %407 = vmatprep.subr.mxu0 0.0
  %408 = vmatpush1.msra.mxu0 %v334
  %409 = vmatprep.subr.mxu0 0.0
  %410 = vmatpush1.msra.mxu0 %v335
  %411 = vmatprep.subr.mxu0 0.0
  %412 = vmatpush1.msra.mxu0 %v336
  %413 = vmatprep.subr.mxu0 0.0
  %414 = vmatpush1.msra.mxu0 %v337
  %415 = vmatprep.subr.mxu0 0.0
  %416 = vmatpush1.msra.mxu0 %v338
  %417 = vmatprep.subr.mxu0 0.0
  %418 = vmatpush1.msra.mxu0 %v339
  %419 = vmatprep.subr.mxu0 0.0
  %420 = vmatpush1.msra.mxu0 %v340
  %421 = vmatprep.subr.mxu0 0.0
  %422 = vmatpush1.msra.mxu0 %v341
  %423 = vmatprep.subr.mxu0 0.0
  %424 = vmatpush1.msra.mxu0 %v342
  %425 = vmatprep.subr.mxu0 0.0
  %426 = vmatpush1.msra.mxu0 %v343
  %427 = vmatprep.subr.mxu0 0.0
  %428 = vmatpush1.msra.mxu0 %v344
  %429 = vmatprep.subr.mxu0 0.0
  %430 = vmatpush1.msra.mxu0 %v345
  %431 = vmatprep.subr.mxu0 0.0
  %432 = vmatpush1.msra.mxu0 %v346
  %433 = vmatprep.subr.mxu0 0.0
  %434 = vmatpush1.msra.mxu0 %v347
  %435 = vmatprep.subr.mxu0 0.0
  %436 = vmatpush1.msra.mxu0 %v348
  %437 = vmatprep.subr.mxu0 0.0
  %438 = vmatpush1.msra.mxu0 0.0
  %439 = vmatprep.subr.mxu0 0.0
  %440 = vmatpush1.msra.mxu0 0.0
  %441 = vmatprep.subr.mxu0 0.0
  %442 = vmatpush1.msra.mxu0 0.0
  %443 = vmatprep.subr.mxu0 0.0
  %444 = vmatpush1.msra.mxu0 0.0
  %445 = vmatprep.subr.mxu0 0.0
  %446 = vmatpush1.msra.mxu0 0.0
  %447 = vmatprep.subr.mxu0 0.0
  %448 = vmatpush1.msra.mxu0 0.0
  %449 = vmatprep.subr.mxu0 0.0
  %450 = vmatpush1.msra.mxu0 0.0
  %451 = vmatprep.subr.mxu0 0.0
  %452 = vmatpush1.msra.mxu0 0.0
  %453 = vmatprep.subr.mxu0 0.0
  %454 = vmatpush1.msra.mxu0 0.0
  %455 = vmatprep.subr.mxu0 0.0
  %456 = vmatpush1.msra.mxu0 0.0
  %457 = vmatprep.subr.mxu0 0.0
  %458 = vmatpush1.msra.mxu0 0.0
  %459 = vmatprep.subr.mxu0 0.0
  %460 = vmatpush1.msra.mxu0 0.0
  %461 = vmatprep.subr.mxu0 0.0
  %462 = vmatpush1.msra.mxu0 0.0
  %463 = vmatprep.subr.mxu0 0.0
  %464 = vmatpush1.msra.mxu0 0.0
  %465 = vmatprep.subr.mxu0 0.0
  %466 = vmatpush1.msra.mxu0 0.0
  %467 = vmatprep.subr.mxu0 0.0
  %468 = vmatpush1.msra.mxu0 0.0
  %469 = vmatprep.mubr.f32.mxu0 0.0
  %470 = vmatmul.mubr.f32.gmra.mrb[0].mxu0 %v349
  %v471 = vpop.f32.mrb[0].mxu0
  %v472 = vadd.f32 %v368, %v471
  %v473 = vpop.f32.mrb[0].mxu0
  %474 = vmatprep.mubr.f32.mxu0 0.0
  %475 = vmatmul.mubr.f32.gmra.mrb[0].mxu0 %v350
  %v476 = vpop.f32.mrb[0].mxu0
  %v477 = vadd.f32 %v373, %v476
  %v478 = vpop.f32.mrb[0].mxu0
  %479 = vmatprep.mubr.f32.mxu0 0.0
  %480 = vmatmul.mubr.f32.gmra.mrb[0].mxu0 %v351
  %v481 = vpop.f32.mrb[0].mxu0
  %v482 = vadd.f32 %v378, %v481
  %v483 = vpop.f32.mrb[0].mxu0
  %484 = vmatprep.mubr.f32.mxu0 0.0
  %485 = vmatmul.mubr.f32.gmra.mrb[0].mxu0 %v352
  %v486 = vpop.f32.mrb[0].mxu0
  %v487 = vadd.f32 %v383, %v486
  %v488 = vpop.f32.mrb[0].mxu0
  %489 = vmatprep.mubr.f32.mxu0 0.0
  %490 = vmatmul.mubr.f32.gmra.mrb[0].mxu0 %v353
  %v491 = vpop.f32.mrb[0].mxu0
  %v492 = vadd.f32 %v388, %v491
  %v493 = vpop.f32.mrb[0].mxu0
  %494 = vmatprep.mubr.f32.mxu0 0.0
  %495 = vmatmul.mubr.f32.gmra.mrb[0].mxu0 %v354
  %v496 = vpop.f32.mrb[0].mxu0
  %v497 = vadd.f32 %v393, %v496
  %v498 = vpop.f32.mrb[0].mxu0
  %499 = vmatprep.mubr.f32.mxu0 0.0
  %500 = vmatmul.mubr.f32.gmra.mrb[0].mxu0 %v355
  %v501 = vpop.f32.mrb[0].mxu0
  %v502 = vadd.f32 %v398, %v501
  %v503 = vpop.f32.mrb[0].mxu0
  %504 = vmatprep.mubr.f32.mxu0 0.0
  %505 = vmatmul.mubr.f32.gmra.mrb[0].mxu0 %v356
  %v506 = vpop.f32.mrb[0].mxu0
  %v507 = vadd.f32 %v403, %v506
  %v508 = vpop.f32.mrb[0].mxu0
  %509 = vdwg.mxu0
  %v510 = vmax.f32 %v472, 0.0
  %v511 = vmax.f32 %v477, 0.0
  %v512 = vmax.f32 %v482, 0.0
  %v513 = vmax.f32 %v487, 0.0
  %v514 = vmax.f32 %v492, 0.0
  %v515 = vmax.f32 %v497, 0.0
  %v516 = vmax.f32 %v502, 0.0
  %v517 = vmax.f32 %v507, 0.0
  %v518 = vld [vmem:[%s5] sm:$0xf]
  %v519 = vld [vmem:[%s6] sm:$0xf]
  %521 = vset.pattern.permute.xlu0 0
  %522 = vperm.xlu0 %521, %v519
  %v523 = vpop.permute.xlu0 %522
  %vm525 = vcmask 523264
  %v527 = vsel %vm525, %v518, 0
  %529 = vmatprep.subr.mxu0 0.0
  %530 = vmatpush1.msra.mxu0 %v510
  %531 = vmatprep.subr.mxu0 0.0
  %532 = vmatpush1.msra.mxu0 %v511
  %533 = vmatprep.subr.mxu0 0.0
  %534 = vmatpush1.msra.mxu0 %v512
  %535 = vmatprep.subr.mxu0 0.0
  %536 = vmatpush1.msra.mxu0 %v513
  %537 = vmatprep.subr.mxu0 0.0
  %538 = vmatpush1.msra.mxu0 %v514
  %539 = vmatprep.subr.mxu0 0.0
  %540 = vmatpush1.msra.mxu0 %v515
  %541 = vmatprep.subr.mxu0 0.0
  %542 = vmatpush1.msra.mxu0 %v516
  %543 = vmatprep.subr.mxu0 0.0
  %544 = vmatpush1.msra.mxu0 %v517
  %545 = vmatprep.subr.mxu0 0.0
  %546 = vmatpush1.msra.mxu0 0.0
  %547 = vmatprep.subr.mxu0 0.0
  %548 = vmatpush1.msra.mxu0 0.0
  %549 = vmatprep.subr.mxu0 0.0
  %550 = vmatpush1.msra.mxu0 0.0
  %551 = vmatprep.subr.mxu0 0.0
  %552 = vmatpush1.msra.mxu0 0.0
  %553 = vmatprep.subr.mxu0 0.0
  %554 = vmatpush1.msra.mxu0 0.0
  %555 = vmatprep.subr.mxu0 0.0
  %556 = vmatpush1.msra.mxu0 0.0
  %557 = vmatprep.subr.mxu0 0.0
  %558 = vmatpush1.msra.mxu0 0.0
  %559 = vmatprep.subr.mxu0 0.0
  %560 = vmatpush1.msra.mxu0 0.0
  %561 = vmatprep.subr.mxu0 0.0
  %562 = vmatpush1.msra.mxu0 0.0
  %563 = vmatprep.subr.mxu0 0.0
  %564 = vmatpush1.msra.mxu0 0.0
  %565 = vmatprep.subr.mxu0 0.0
  %566 = vmatpush1.msra.mxu0 0.0
  %567 = vmatprep.subr.mxu0 0.0
  %568 = vmatpush1.msra.mxu0 0.0
  %569 = vmatprep.subr.mxu0 0.0
  %570 = vmatpush1.msra.mxu0 0.0
  %571 = vmatprep.subr.mxu0 0.0
  %572 = vmatpush1.msra.mxu0 0.0
  %573 = vmatprep.subr.mxu0 0.0
  %574 = vmatpush1.msra.mxu0 0.0
  %575 = vmatprep.subr.mxu0 0.0
  %576 = vmatpush1.msra.mxu0 0.0
  %577 = vmatprep.subr.mxu0 0.0
  %578 = vmatpush1.msra.mxu0 0.0
  %579 = vmatprep.subr.mxu0 0.0
  %580 = vmatpush1.msra.mxu0 0.0
  %581 = vmatprep.subr.mxu0 0.0
  %582 = vmatpush1.msra.mxu0 0.0
  %583 = vmatprep.subr.mxu0 0.0
  %584 = vmatpush1.msra.mxu0 0.0
  %585 = vmatprep.subr.mxu0 0.0
  %586 = vmatpush1.msra.mxu0 0.0
  %587 = vmatprep.subr.mxu0 0.0
  %588 = vmatpush1.msra.mxu0 0.0
  %589 = vmatprep.subr.mxu0 0.0
  %590 = vmatpush1.msra.mxu0 0.0
  %591 = vmatprep.subr.mxu0 0.0
  %592 = vmatpush1.msra.mxu0 0.0
  %593 = vmatprep.mubr.f32.mxu0 0.0
  %594 = vmatmul.mubr.f32.gmra.mrb[0].mxu0 %v527
  %v595 = vpop.f32.mrb[0].mxu0
  %v596 = vadd.f32 %v523, %v595
  %v597 = vpop.f32.mrb[0].mxu0
  %598 = vdwg.mxu0
  %vm599 = vcmask 1043456
  %v600 = vsel %vm599, %v596, -inf
  %v601 = vrot.slane %v600, 4
  %v602 = vmax.f32 %v600, %v601
  %v603 = vrot.slane %v602, 2
  %v604 = vmax.f32 %v602, %v603
  %v605 = vrot.slane %v604, 1
  %v606 = vmax.f32 %v604, %v605
  %v607 = vsub.f32 %v596, %v606
  %v608 = vmul.f32 %v607, 1.442695
  %v609 = vpow.pop %v608
  %v610 = vsel %vm599, %v609, 0.0
  %v611 = vrot.slane %v610, 4
  %v612 = vadd.f32 %v610, %v611
  %v613 = vrot.slane %v612, 2
  %v614 = vadd.f32 %v612, %v613
  %v615 = vrot.slane %v614, 1
  %v616 = vadd.f32 %v614, %v615
  %v617 = vrcp.pop %v616
  %v618 = vmul.f32 %v609, %v617
  %619 = vst [vmem:[%s7] sm:$0xf] %v618
  // Predicated region
  $region30: #{action_forward.1} parent=0 // pred_check
    _
  $region31: #{action_forward.1} parent=0 // pred_check_branch
    %621 = sbr.rel (0) target = $region33
  $region32: #{action_forward.1} parent=0 // pred_region
    _
  $region33: #{action_forward.1} parent=0 // pred_fallthru
    _
  // Predicated region
  $region34: #{action_forward.1} parent=0 // pred_check
    _
  $region35: #{action_forward.1} parent=0 // pred_check_branch
    %623 = sbr.rel (0) target = $region37
  $region36: #{action_forward.1} parent=0 // pred_region
    _
  $region37: #{action_forward.1} parent=0 // pred_fallthru
    _

</llo_original>
